<compile_context>
chip_gen: v5e
topology: v5e:2x2
jax: 0.10.0
libtpu: 0.0.40
codegen_flags: <defaults>
</compile_context>

<pallas_src>
import math
import numpy as np
import jax
import jax.numpy as jnp
from jax.experimental import pallas as pl
from jax.experimental.pallas import tpu as pltpu


def _round_up(x, m):
    return ((x + m - 1) // m) * m


def _vmem_capacity_bytes():
    """Physical VMEM of the attached TPU (fallback: 64 MiB, safe for all gens)."""
    try:
        info = pltpu.get_tpu_info()
        cap = getattr(info, "vmem_capacity_bytes", None)
        if cap:
            return int(cap)
    except Exception:
        pass
    return 64 * 1024 * 1024


def _make_kernel(th, wo_al, cin, cout, kh, kw, fold_kw):
    def kernel(a_ref, h_ref, w_ref, o_ref, x_scr):
        # a_ref : (1, th, w_in, cin_eff)            main input rows for this tile
        # h_ref : (1, max(kh-1,1), w_in, cin_eff)   vertical halo rows (next tile's top)
        # w_ref : (kh, kw*cin, cout) if fold_kw else (kh*kw, cin, cout)
        # o_ref : (1, th, wo_al, cout)
        # x_scr : (th + kh - 1, w_in, cin_eff)      stitched rows (VMEM scratch)

        # Stitch main rows + vertical halo into one contiguous scratch so every
        # row-tap is a cheap outer-dim slice of it.
        # TODO(synk): an element-offset (overlapping-window) input BlockSpec would
        # remove this VMEM->VMEM stitch copy entirely.
        x_scr[pl.ds(0, th), :, :] = a_ref[0, :, :, :]
        if kh > 1:
            x_scr[pl.ds(th, kh - 1), :, :] = h_ref[0, :, :, :]

        acc = None
        if fold_kw:
            # Input is already im2col'd along W in the wrapper: contraction depth is
            # kw*cin, only kh matmuls, no misaligned sublane slices in the kernel.
            for dh in range(kh):                      # static, unrolled
                lhs = x_scr[pl.ds(dh, th), :, :].reshape(th * wo_al, kw * cin)
                c = jnp.dot(lhs, w_ref[dh], preferred_element_type=jnp.float32)
                acc = c if acc is None else acc + c
        else:
            # Large-Cin path: K = cin already fills the MXU; keep per-tap matmuls.
            for dw in range(kw):                      # static, unrolled conv taps
                # One sublane-offset window per dw, reused across all dh.
                xw = x_scr[:, pl.ds(dw, wo_al), :]
                for dh in range(kh):
                    lhs = xw[dh:dh + th].reshape(th * wo_al, cin)
                    c = jnp.dot(lhs, w_ref[dh * kw + dw],
                                preferred_element_type=jnp.float32)
                    acc = c if acc is None else acc + c

        # Chained f32 sum -> single store (no accumulator scratch RMW per tap).
        # TODO(synk): for cout < 128 this store is a masked partial-lane vst; a
        # lane-packed (wo_al*cout) output layout would make it dense.
        o_ref[...] = acc.reshape(1, th, wo_al, cout).astype(o_ref.dtype)

    return kernel


def _pick_tile_rows(ho, n_batch, w_in, cin_eff, wo_al, cout, kh,
                    weight_bytes, itemsize, fold_kw, vmem_budget_bytes):
    """Output-row tile height / tile count under a VMEM budget.

    Counts double-buffered input/halo/output/weight blocks, the stitched-input
    scratch AND the in-kernel temporaries (f32 partial sums, per-dw slice copies).
    """
    halo_rows = max(kh - 1, 1)
    align = 8 if kh <= 1 else math.lcm(8, kh - 1)     # th multiple of (kh-1) and 8

    per_row = (2 * w_in * cin_eff * itemsize          # input block (double buffered)
               + 2 * wo_al * cout * itemsize          # output block (double buffered)
               + w_in * cin_eff * itemsize            # stitched-input scratch
               + 2 * wo_al * cout * 4)                # f32 matmul partial sums (~2 live)
    if not fold_kw:
        per_row += 2 * wo_al * cin_eff * itemsize     # per-dw shifted-slice temporaries
    fixed = (2 * halo_rows * w_in * cin_eff * itemsize  # halo block (double buffered)
             + (kh - 1) * w_in * cin_eff * itemsize     # halo rows of the scratch
             + 2 * weight_bytes)                        # weights (double buffered)

    avail = max(0, vmem_budget_bytes - fixed)
    th = max(align, (avail // per_row) // align * align)

    ho_al = _round_up(ho, align)
    th = min(th, ho_al)
    n_tiles = pl.cdiv(ho_al, th)
    # v7x megacore: make the parallel grid extent even so both TensorCores get work
    # (costs one extra ~0.35us grid step on single-core chips — negligible).
    if (n_batch * n_tiles) % 2 == 1 and (ho_al // align) >= n_tiles + 1:
        n_tiles += 1
    # Minimise padded-row waste: smallest aligned tile that still yields n_tiles.
    th = _round_up(pl.cdiv(ho_al, n_tiles), align)

    est_bytes = fixed + th * per_row
    return th, n_tiles, est_bytes


def mpconv2d(x, weight, gain=1.0):
    """Eval-mode forward of MPConv2D (groups=1).

    x      : (N, Cin, H, W)   NCHW
    weight : (Cout, Cin, Kh, Kw)
    """
    n, cin, h, w_sp = x.shape
    cout, cin_w, kh, kw = weight.shape
    assert cin_w == cin, "groups != 1 not supported"
    # TODO(synk): grouped conv (groups > 1), the 2-D weight (plain matmul) path,
    # and training-mode weight normalization (normalize()) are not implemented;
    # this reproduces eval-mode, groups=1 semantics.

    ph, pw = kh // 2, kw // 2
    assert w_sp > pw, "reflection pad requires W > kw // 2"

    # w = w.float(); w = w * (gain / w[0].numel()**0.5); w = w.to(x.dtype)
    scale = jnp.asarray(gain, jnp.float32) / math.sqrt(cin * kh * kw)
    w_s = (weight.astype(jnp.float32) * scale).astype(x.dtype)
    # (Cout, Cin, Kh, Kw) -> (Kh, Kw, Cin, Cout)
    w_khwc = jnp.transpose(w_s, (2, 3, 1, 0))

    # Geometry: output width padded to a multiple of 8 so in-kernel reshapes are
    # layout-preserving; input width padded so every tap window [dw, dw+wo_al) fits.
    w_refl = w_sp + 2 * pw
    ho = h + 2 * ph - kh + 1
    wo = w_refl - kw + 1
    wo_al = _round_up(wo, 8)
    wp = wo_al + kw - 1

    itemsize = jnp.dtype(x.dtype).itemsize

    # Fold the Kw taps into the contraction (wrapper-side im2col along W) when Cin
    # alone would badly under-fill the MXU's 128/256-deep contraction.
    fold_kw = (kw > 1) and (cin < 256)
    if fold_kw:
        cin_eff, w_in = kw * cin, wo_al
        w_mat = w_khwc.reshape(kh, kw * cin, cout)
    else:
        cin_eff, w_in = cin, wp
        w_mat = w_khwc.reshape(kh * kw, cin, cout)
    weight_bytes = int(np.prod(w_mat.shape)) * itemsize

    # Generation-aware VMEM budgeting (v5e/v6e: 128 MiB physical, v7x: 64 MiB).
    vmem_cap = _vmem_capacity_bytes()
    vmem_budget = max(12 * 2 ** 20, int(0.375 * vmem_cap))   # ~48 MiB / ~24 MiB
    th, n_row_tiles, est_bytes = _pick_tile_rows(
        ho, n, w_in, cin_eff, wo_al, cout, kh, weight_bytes, itemsize,
        fold_kw, vmem_budget)
    ho_p = n_row_tiles * th          # padded output rows
    hp = ho_p + kh - 1               # padded input rows

    # NCHW -> NHWC (channels on the lane axis)
    x_nhwc = jnp.transpose(x, (0, 2, 3, 1))
    # horizontal reflection pad (ReflectionPad2d((kw//2, kw//2, 0, 0)))
    if pw != 0:
        x_nhwc = jnp.pad(x_nhwc, ((0, 0), (0, 0), (pw, pw), (0, 0)),
                         mode="reflect")
    # vertical zero pad (conv2d padding=(kh//2, 0)) + alignment padding
    x_nhwc = jnp.pad(
        x_nhwc, ((0, 0), (ph, hp - h - ph), (0, wp - w_refl), (0, 0)))
    if fold_kw:
        # im2col along W: (N, hp, wo_al, kw*cin); lane-concat of shifted windows.
        x_in = jnp.concatenate(
            [x_nhwc[:, :, dw:dw + wo_al, :] for dw in range(kw)], axis=-1)
    else:
        x_in = x_nhwc
    # TODO(synk): in an NHWC end-to-end layer stack these transposes / pads (and the
    # reflection pad) would be fused into producers instead of extra HBM round trips.

    halo_rows = max(kh - 1, 1)
    if kh > 1:
        halo_step = th // (kh - 1)           # th is a multiple of (kh - 1)
        halo_map = lambda b, t: (b, (t + 1) * halo_step, 0, 0)
    else:
        halo_map = lambda b, t: (b, 0, 0, 0)

    kernel = _make_kernel(th, wo_al, cin, cout, kh, kw, fold_kw)
    # Never exceed ~7/8 of physical VMEM (v7x is only 64 MiB); give headroom over
    # the estimate (which now includes in-kernel temporaries).
    vmem_limit = int(min(0.875 * vmem_cap,
                         max(32 * 2 ** 20, 1.35 * est_bytes)))

    out_nhwc = pl.pallas_call(
        kernel,
        out_shape=jax.ShapeDtypeStruct((n, ho_p, wo_al, cout), x.dtype),
        grid=(n, n_row_tiles),
        in_specs=[
            pl.BlockSpec((1, th, w_in, cin_eff), lambda b, t: (b, t, 0, 0)),
            pl.BlockSpec((1, halo_rows, w_in, cin_eff), halo_map),
            pl.BlockSpec(w_mat.shape, lambda b, t: (0, 0, 0)),
        ],
        out_specs=pl.BlockSpec((1, th, wo_al, cout), lambda b, t: (b, t, 0, 0)),
        scratch_shapes=[
            pltpu.VMEM((th + kh - 1, w_in, cin_eff), x.dtype),
        ],
        compiler_params=pltpu.CompilerParams(
            dimension_semantics=("parallel", "parallel"),
            vmem_limit_bytes=vmem_limit,
        ),
    )(x_in, x_in, w_mat)

    # crop alignment padding, NHWC -> NCHW
    return jnp.transpose(out_nhwc[:, :ho, :wo, :], (0, 3, 1, 2))


def _reference(x, weight, gain=1.0):
    """Pure-JAX reference matching the PyTorch eval-mode forward."""
    cout, cin, kh, kw = weight.shape
    ph, pw = kh // 2, kw // 2
    w = weight.astype(jnp.float32) * (jnp.asarray(gain, jnp.float32)
                                      / math.sqrt(cin * kh * kw))
    w = w.astype(x.dtype)
    x_pad = x
    if pw != 0:
        x_pad = jnp.pad(x, ((0, 0), (0, 0), (0, 0), (pw, pw)), mode="reflect")
    return jax.lax.conv_general_dilated(
        x_pad, w, window_strides=(1, 1), padding=((ph, ph), (0, 0)),
        dimension_numbers=("NCHW", "OIHW", "NCHW"))


if __name__ == "__main__":
    key = jax.random.PRNGKey(0)
    k_w, k_x = jax.random.split(key)

    # small shapes consistent with the module: NCHW input, 3x3 kernel
    N, Cin, H, W = 2, 4, 16, 16
    Cout, Kh, Kw = 8, 3, 3

    weight = jax.random.normal(k_w, (Cout, Cin, Kh, Kw), jnp.float32)
    x = jax.random.normal(k_x, (N, Cin, H, W), jnp.float32)

    out = jax.block_until_ready(mpconv2d(x, weight, gain=1.0))
    ref = jax.block_until_ready(_reference(x, weight, gain=1.0))

    np.testing.assert_allclose(np.asarray(out), np.asarray(ref),
                               rtol=1e-4, atol=1e-4)
    assert out.shape == (N, Cout, H, W) and out.dtype == x.dtype

    print("KERNEL_OK")
</pallas_src>

<mosaic_0001>
module attributes {stable_mosaic.version = 11 : i64} {
  func.func @kernel(%arg0: i32, %arg1: i32, %arg2: memref<1x16x16x12xf32, #tpu.memory_space<vmem>>, %arg3: memref<1x2x16x12xf32, #tpu.memory_space<vmem>>, %arg4: memref<3x12x8xf32, #tpu.memory_space<vmem>>, %arg5: memref<1x16x16x8xf32, #tpu.memory_space<vmem>>, %arg6: memref<18x16x12xf32, #tpu.memory_space<vmem>>) attributes {dimension_semantics = [#tpu.dimension_semantics<parallel>, #tpu.dimension_semantics<parallel>], iteration_bounds = array<i64: 2, 1>, scalar_prefetch = 0 : i64, scratch_operands = 1 : i64, tpu.core_type = #tpu.core_type<tc>, window_params = [{transform_indices = @transform_0, window_bounds = array<i64: 1, 16, 16, 12>}, {transform_indices = @transform_1, window_bounds = array<i64: 1, 2, 16, 12>}, {pipeline_mode = #tpu.pipeline_mode<synchronous>, transform_indices = @transform_2, window_bounds = array<i64: 3, 12, 8>}, {transform_indices = @transform_3, window_bounds = array<i64: 1, 16, 16, 8>}]} {
    %c0 = arith.constant 0 : index
    %c0_0 = arith.constant 0 : index
    %c0_1 = arith.constant 0 : index
    %c0_2 = arith.constant 0 : index
    %0 = vector.load %arg2[%c0, %c0_0, %c0_1, %c0_2] : memref<1x16x16x12xf32, #tpu.memory_space<vmem>>, vector<1x16x16x12xf32>
    %1 = vector.shape_cast %0 : vector<1x16x16x12xf32> to vector<16x16x12xf32>
    %c0_3 = arith.constant 0 : index
    %c0_4 = arith.constant 0 : index
    %c0_5 = arith.constant 0 : index
    %2 = vector.load %arg6[%c0_3, %c0_4, %c0_5] : memref<18x16x12xf32, #tpu.memory_space<vmem>>, vector<16x16x12xf32>
    tpu.vector_store %arg6[%c0_3, %c0_4, %c0_5], %1 {strides = array<i32>} : memref<18x16x12xf32, #tpu.memory_space<vmem>>, vector<16x16x12xf32>,
    %c0_6 = arith.constant 0 : index
    %c0_7 = arith.constant 0 : index
    %c0_8 = arith.constant 0 : index
    %c0_9 = arith.constant 0 : index
    %3 = vector.load %arg3[%c0_6, %c0_7, %c0_8, %c0_9] : memref<1x2x16x12xf32, #tpu.memory_space<vmem>>, vector<1x2x16x12xf32>
    %4 = vector.shape_cast %3 : vector<1x2x16x12xf32> to vector<2x16x12xf32>
    %c16 = arith.constant 16 : index
    %c0_10 = arith.constant 0 : index
    %c0_11 = arith.constant 0 : index
    %5 = vector.load %arg6[%c16, %c0_10, %c0_11] : memref<18x16x12xf32, #tpu.memory_space<vmem>>, vector<2x16x12xf32>
    tpu.vector_store %arg6[%c16, %c0_10, %c0_11], %4 {strides = array<i32>} : memref<18x16x12xf32, #tpu.memory_space<vmem>>, vector<2x16x12xf32>,
    %c0_12 = arith.constant 0 : index
    %c0_13 = arith.constant 0 : index
    %c0_14 = arith.constant 0 : index
    %6 = vector.load %arg6[%c0_12, %c0_13, %c0_14] : memref<18x16x12xf32, #tpu.memory_space<vmem>>, vector<16x16x12xf32>
    %7 = vector.shape_cast %6 : vector<16x16x12xf32> to vector<256x12xf32>
    %c0_15 = arith.constant 0 : index
    %c0_16 = arith.constant 0 : index
    %c0_17 = arith.constant 0 : index
    %8 = vector.load %arg4[%c0_15, %c0_16, %c0_17] : memref<3x12x8xf32, #tpu.memory_space<vmem>>, vector<1x12x8xf32>
    %9 = vector.shape_cast %8 : vector<1x12x8xf32> to vector<12x8xf32>
    %cst = arith.constant dense<0.000000e+00> : vector<256x8xf32>
    %10 = tpu.matmul %7, %9, %cst {dimension_numbers = #tpu.dot_dimension_numbers<[1], [0], [0], [1], [0, 0, 1, 1], [], []>} : vector<256x12xf32>, vector<12x8xf32>, vector<256x8xf32> -> vector<256x8xf32>
    %c1 = arith.constant 1 : index
    %c0_18 = arith.constant 0 : index
    %c0_19 = arith.constant 0 : index
    %11 = vector.load %arg6[%c1, %c0_18, %c0_19] : memref<18x16x12xf32, #tpu.memory_space<vmem>>, vector<16x16x12xf32>
    %12 = vector.shape_cast %11 : vector<16x16x12xf32> to vector<256x12xf32>
    %c1_20 = arith.constant 1 : index
    %c0_21 = arith.constant 0 : index
    %c0_22 = arith.constant 0 : index
    %13 = vector.load %arg4[%c1_20, %c0_21, %c0_22] : memref<3x12x8xf32, #tpu.memory_space<vmem>>, vector<1x12x8xf32>
    %14 = vector.shape_cast %13 : vector<1x12x8xf32> to vector<12x8xf32>
    %cst_23 = arith.constant dense<0.000000e+00> : vector<256x8xf32>
    %15 = tpu.matmul %12, %14, %cst_23 {dimension_numbers = #tpu.dot_dimension_numbers<[1], [0], [0], [1], [0, 0, 1, 1], [], []>} : vector<256x12xf32>, vector<12x8xf32>, vector<256x8xf32> -> vector<256x8xf32>
    %16 = arith.addf %10, %15 : vector<256x8xf32>
    %c2 = arith.constant 2 : index
    %c0_24 = arith.constant 0 : index
    %c0_25 = arith.constant 0 : index
    %17 = vector.load %arg6[%c2, %c0_24, %c0_25] : memref<18x16x12xf32, #tpu.memory_space<vmem>>, vector<16x16x12xf32>
    %18 = vector.shape_cast %17 : vector<16x16x12xf32> to vector<256x12xf32>
    %c2_26 = arith.constant 2 : index
    %c0_27 = arith.constant 0 : index
    %c0_28 = arith.constant 0 : index
    %19 = vector.load %arg4[%c2_26, %c0_27, %c0_28] : memref<3x12x8xf32, #tpu.memory_space<vmem>>, vector<1x12x8xf32>
    %20 = vector.shape_cast %19 : vector<1x12x8xf32> to vector<12x8xf32>
    %cst_29 = arith.constant dense<0.000000e+00> : vector<256x8xf32>
    %21 = tpu.matmul %18, %20, %cst_29 {dimension_numbers = #tpu.dot_dimension_numbers<[1], [0], [0], [1], [0, 0, 1, 1], [], []>} : vector<256x12xf32>, vector<12x8xf32>, vector<256x8xf32> -> vector<256x8xf32>
    %22 = arith.addf %16, %21 : vector<256x8xf32>
    %23 = vector.shape_cast %22 : vector<256x8xf32> to vector<1x16x16x8xf32>
    %c0_30 = arith.constant 0 : index
    %c0_31 = arith.constant 0 : index
    %c0_32 = arith.constant 0 : index
    %c0_33 = arith.constant 0 : index
    %24 = vector.load %arg5[%c0_30, %c0_31, %c0_32, %c0_33] : memref<1x16x16x8xf32, #tpu.memory_space<vmem>>, vector<1x16x16x8xf32>
    tpu.vector_store %arg5[%c0_30, %c0_31, %c0_32, %c0_33], %23 {strides = array<i32>} : memref<1x16x16x8xf32, #tpu.memory_space<vmem>>, vector<1x16x16x8xf32>,
    return
  }
  func.func @transform_0(%arg0: i32, %arg1: i32) -> (i32, i32, i32, i32) {
    %c0_i32 = arith.constant 0 : i32
    %c0_i32_0 = arith.constant 0 : i32
    %c0_i32_1 = arith.constant 0 : i32
    return %arg0, %arg1, %c0_i32, %c0_i32_0 : i32, i32, i32, i32
  }
  func.func @transform_1(%arg0: i32, %arg1: i32) -> (i32, i32, i32, i32) {
    %c1_i32 = arith.constant 1 : i32
    %0 = arith.addi %arg1, %c1_i32 : i32
    %c8_i32 = arith.constant 8 : i32
    %1 = arith.muli %0, %c8_i32 : i32
    %c0_i32 = arith.constant 0 : i32
    %c0_i32_0 = arith.constant 0 : i32
    %c0_i32_1 = arith.constant 0 : i32
    return %arg0, %1, %c0_i32, %c0_i32_0 : i32, i32, i32, i32
  }
  func.func @transform_2(%arg0: i32, %arg1: i32) -> (i32, i32, i32) {
    %c0_i32 = arith.constant 0 : i32
    %c0_i32_0 = arith.constant 0 : i32
    %c0_i32_1 = arith.constant 0 : i32
    %c0_i32_2 = arith.constant 0 : i32
    return %c0_i32, %c0_i32_0, %c0_i32_1 : i32, i32, i32
  }
  func.func @transform_3(%arg0: i32, %arg1: i32) -> (i32, i32, i32, i32) {
    %c0_i32 = arith.constant 0 : i32
    %c0_i32_0 = arith.constant 0 : i32
    %c0_i32_1 = arith.constant 0 : i32
    return %arg0, %arg1, %c0_i32, %c0_i32_0 : i32, i32, i32, i32
  }
}

</mosaic_0001>

<llo_original>
// kernel: tpu_custom_call.1
$region0: #{tpu_custom_call.1}
  #allocation0 [shape = 'u32[]', space=smem, size = 0x4, offset = 0x4, fixed_abs, tag = 'smem constant byte address 0x4 - core index']
  #allocation1 [shape = 'u32[72,128]{1,0:T(1,128)}', space=vmem, size = 0x9000, scoped, tag = 'internal scratch']
  #allocation2 [shape = 'f32[18,16,12]{2,1,0:T(8,128)}', space=vmem, size = 0x24000, scoped, tag = 'scratch operand']
  %s0 = inlined_call_operand.vmem [shape: f32[2,18,16,12], index: 0, kind: input, shape index: {}]
  %s1 = inlined_call_operand.vmem [shape: f32[2,18,16,12], index: 1, kind: input, shape index: {}]
  %s2 = inlined_call_operand.vmem [shape: f32[3,12,8], index: 2, kind: input, shape index: {}]
  %s3 = inlined_call_operand.vmem [shape: f32[2,16,16,8], index: 3, kind: output, shape index: {}]
  %s4 = sld [smem:[#allocation0]]
  $region45: #{tpu_custom_call.1} parent=0
    _
  %s6 = ssub.s32 1, %s4
  %s7 = scalar_select 0, %s6, %s4
  loop: start=0, step=1, limit=4
  $region2: #{tpu_custom_call.1} parent=0 // loop_pre_header
    _
  $region3: #{tpu_custom_call.1} parent=0 // loop_header
    %s9 = sphi 0, %s13
    %p10 = scmp.ge.s32.totalorder %s9, 4
    %s16 = sphi 0, %s28
    %s17 = sphi 0, %s24
    %s18 = sphi 0, %s16
    %s19 = sphi 0, %s17
    %s20 = sphi 0, %s18
    %s21 = sphi 0, %s19
    %s33 = sphi 0, %s35
    %s36 = sphi 0, %s33
    %s37 = sphi 0, %s36
    %s53 = sphi 0, %s37
    %s65 = sphi 0, %s67
    %s68 = sphi 0, %s65
    %s69 = sphi 0, %s68
    %s85 = sphi 0, %s69
    %s89 = sphi 0, %s89
    %s91 = sphi 0, %s89
    %s92 = sphi 0, %s91
    %s106 = sphi 0, %s92
    %s114 = sphi 0, %s116
    %s117 = sphi 0, %s114
    %s118 = sphi 0, %s117
    %s134 = sphi 0, %s118
  $region4: #{tpu_custom_call.1} parent=0 // loop_header_branch
    %12 = sbr.rel (%p10) target = $region8
  $region5: #{tpu_custom_call.1} parent=0 // loop_body
    %s14 = ssub.s32 %s9, 1
    %s15 = ssub.s32 %s9, 2
    %s22 = sadd.s32 1, %s17
    %p23 = scmp.ge.s32.totalorder %s22, 1
    %s24 = scalar_select %p23, 0, %s22
    %s25 = sadd.s32 1, %s16
    %s26 = scalar_select %p23, %s25, %s16
    %p27 = scmp.ge.s32.totalorder %s26, 2
    %s28 = scalar_select %p27, 0, %s26
    %s29 = ssub.s32 %s16, %s28
    %s30 = ssub.s32 %s17, %s24
    %s31 = sor.u32 %s29, %s30
    %p32 = scmp.eq.s32.totalorder %s31, 0
    %s34 = sadd.s32 %s33, 1
    %s35 = scalar_select %p32, %s33, %s34
    %p38 = pneg %p32
    %p39 = scmp.eq.s32.totalorder %s9, 1
    %p40 = por %p38, %p39
    %p41 = scmp.ne.s32.totalorder %s33, %s36
    %p42 = scmp.eq.s32.totalorder %s9, 0
    %p43 = por %p41, %p42
    %p44 = scmp.ne.s32.totalorder %s33, %s36
    %p45 = scmp.eq.s32.totalorder %s14, 1
    %p46 = por %p44, %p45
    %p47 = scmp.ne.s32.totalorder %s36, %s37
    %p48 = scmp.eq.s32.totalorder %s14, 0
    %p49 = por %p47, %p48
    %p50 = scmp.ne.s32.totalorder %s36, %s37
    %p51 = scmp.eq.s32.totalorder %s15, 1
    %p52 = por %p50, %p51
    %p54 = scmp.ne.s32.totalorder %s37, %s53
    %p55 = scmp.eq.s32.totalorder %s15, 0
    %p56 = por %p54, %p55
    %s57 = sadd.s32 %s17, 1
    %s58 = smul.u32 %s57, 8
    %s59 = sadd.s32 %s24, 1
    %s60 = smul.u32 %s59, 8
    %s61 = ssub.s32 %s16, %s28
    %s62 = ssub.s32 %s58, %s60
    %s63 = sor.u32 %s61, %s62
    %p64 = scmp.eq.s32.totalorder %s63, 0
    %s66 = sadd.s32 %s65, 1
    %s67 = scalar_select %p64, %s65, %s66
    %p70 = pneg %p64
    %p71 = scmp.eq.s32.totalorder %s9, 1
    %p72 = por %p70, %p71
    %p73 = scmp.ne.s32.totalorder %s65, %s68
    %p74 = scmp.eq.s32.totalorder %s9, 0
    %p75 = por %p73, %p74
    %p76 = scmp.ne.s32.totalorder %s65, %s68
    %p77 = scmp.eq.s32.totalorder %s14, 1
    %p78 = por %p76, %p77
    %p79 = scmp.ne.s32.totalorder %s68, %s69
    %p80 = scmp.eq.s32.totalorder %s14, 0
    %p81 = por %p79, %p80
    %p82 = scmp.ne.s32.totalorder %s68, %s69
    %p83 = scmp.eq.s32.totalorder %s15, 1
    %p84 = por %p82, %p83
    %p86 = scmp.ne.s32.totalorder %s69, %s85
    %p87 = scmp.eq.s32.totalorder %s15, 0
    %p88 = por %p86, %p87
    %s90 = sadd.s32 %s89, 1
    %p93 = scmp.eq.s32.totalorder %s9, 1
    %p94 = scmp.ne.s32.totalorder %s89, %s91
    %p95 = scmp.eq.s32.totalorder %s9, 0
    %p96 = por %p94, %p95
    %p97 = scmp.ne.s32.totalorder %s89, %s91
    %p98 = scmp.eq.s32.totalorder %s14, 1
    %p99 = por %p97, %p98
    %p100 = scmp.ne.s32.totalorder %s91, %s92
    %p101 = scmp.eq.s32.totalorder %s14, 0
    %p102 = por %p100, %p101
    %p103 = scmp.ne.s32.totalorder %s91, %s92
    %p104 = scmp.eq.s32.totalorder %s15, 1
    %p105 = por %p103, %p104
    %p107 = scmp.ne.s32.totalorder %s92, %s106
    %p108 = scmp.eq.s32.totalorder %s15, 0
    %p109 = por %p107, %p108
    %s110 = ssub.s32 %s16, %s28
    %s111 = ssub.s32 %s17, %s24
    %s112 = sor.u32 %s110, %s111
    %p113 = scmp.eq.s32.totalorder %s112, 0
    %s115 = sadd.s32 %s114, 1
    %s116 = scalar_select %p113, %s114, %s115
    %p119 = pneg %p113
    %p120 = scmp.eq.s32.totalorder %s9, 1
    %p121 = por %p119, %p120
    %p122 = scmp.ne.s32.totalorder %s114, %s117
    %p123 = scmp.eq.s32.totalorder %s9, 0
    %p124 = por %p122, %p123
    %p125 = scmp.ne.s32.totalorder %s114, %s117
    %p126 = scmp.eq.s32.totalorder %s14, 1
    %p127 = por %p125, %p126
    %p128 = scmp.ne.s32.totalorder %s117, %s118
    %p129 = scmp.eq.s32.totalorder %s14, 0
    %p130 = por %p128, %p129
    %p131 = scmp.ne.s32.totalorder %s117, %s118
    %p132 = scmp.eq.s32.totalorder %s15, 1
    %p133 = por %p131, %p132
    %p135 = scmp.ne.s32.totalorder %s118, %s134
    %p136 = scmp.eq.s32.totalorder %s15, 0
    %p137 = por %p135, %p136
    %p138 = scmp.le.s32.totalorder 1, %s9
    %p139 = scmp.lt.s32.totalorder %s9, 3
    %p140 = pnand %p138, %p139
    %p141 = pneg %p140
    // Predicated region
    $region9: #{tpu_custom_call.1} parent=5 // pred_check
      _
    $region10: #{tpu_custom_call.1} parent=5 // pred_check_branch
      %143 = sbr.rel (%p140) target = $region12
    $region11: #{tpu_custom_call.1} parent=5 // pred_region
      %s144 = ssub.s32 %s9, 1
      // Predicated region
      $region13: #{tpu_custom_call.1} parent=11 // pred_check
        %p145 = pneg %p102
      $region14: #{tpu_custom_call.1} parent=11 // pred_check_branch
        %147 = sbr.rel (%p145) target = $region16
      $region15: #{tpu_custom_call.1} parent=11 // pred_region
        _
      $region16: #{tpu_custom_call.1} parent=11 // pred_fallthru
        _
    $region12: #{tpu_custom_call.1} parent=5 // pred_fallthru
      _
    %p148 = scmp.lt.s32.totalorder %s9, 2
    // Predicated region
    $region17: #{tpu_custom_call.1} parent=5 // pred_check
      %p149 = pneg %p148
    $region18: #{tpu_custom_call.1} parent=5 // pred_check_branch
      %151 = sbr.rel (%p149) target = $region20
    $region19: #{tpu_custom_call.1} parent=5 // pred_region
      // Predicated region
      $region21: #{tpu_custom_call.1} parent=19 // pred_check
        %p152 = pneg %p43
      $region22: #{tpu_custom_call.1} parent=19 // pred_check_branch
        %154 = sbr.rel (%p152) target = $region24
      $region23: #{tpu_custom_call.1} parent=19 // pred_region
        %s155 = smul.u32 16, %s17
        %s156 = ssub.s32 18, %s155
        %p157 = scmp.lt.s32.totalorder %s156, 16
        %s158 = scalar_select %p157, %s156, 16
        %s159 = smul.u32 8, %s158
        %s160 = smul.u32 %s159, 2
        %p161 = scmp.lt.s32.totalorder %s16, 1
        %s162 = scalar_select %p161, %s16, 1
        %p163 = scmp.lt.s32.totalorder %s155, 17
        %s164 = scalar_select %p163, %s155, 17
        %s165 = smul.addr %s164, 2
        %s166 = smul.addr %s162, 36
        %s167 = sadd.s32 %s165, %s166
        %s168 = smul.addr %s167, 8
        %s169 = scalar_lea.vmem %s0, %s168
        %s170 = smul.u32 16, %s17
        %s171 = ssub.s32 18, %s170
        %p172 = scmp.lt.s32.totalorder %s171, 16
        %s173 = scalar_select %p172, %s171, 16
        %s174 = smul.u32 8, %s173
        %s175 = smul.u32 %s174, 2
      $region24: #{tpu_custom_call.1} parent=19 // pred_fallthru
        _
      // Predicated region
      $region25: #{tpu_custom_call.1} parent=19 // pred_check
        %p176 = pneg %p75
      $region26: #{tpu_custom_call.1} parent=19 // pred_check_branch
        %178 = sbr.rel (%p176) target = $region28
      $region27: #{tpu_custom_call.1} parent=19 // pred_region
        %s179 = sadd.s32 %s17, 1
        %s180 = smul.u32 %s179, 8
        %s181 = smul.u32 2, %s180
        %p182 = scmp.lt.s32.totalorder %s16, 1
        %s183 = scalar_select %p182, %s16, 1
        %p184 = scmp.lt.s32.totalorder %s181, 17
        %s185 = scalar_select %p184, %s181, 17
        %s186 = smul.addr %s185, 2
        %s187 = smul.addr %s183, 36
        %s188 = sadd.s32 %s186, %s187
        %s189 = smul.addr %s188, 8
        %s190 = scalar_lea.vmem %s1, %s189
        %s191 = sadd.s32 %s17, 1
        %s192 = smul.u32 %s191, 8
        %s193 = smul.u32 2, %s192
      $region28: #{tpu_custom_call.1} parent=19 // pred_fallthru
        _
    $region20: #{tpu_custom_call.1} parent=5 // pred_fallthru
      _
    %p194 = scmp.le.s32.totalorder 1, %s9
    %p195 = scmp.lt.s32.totalorder %s9, 3
    %p196 = pnand %p194, %p195
    %p197 = pneg %p196
    // Predicated region
    $region29: #{tpu_custom_call.1} parent=5 // pred_check
      _
    $region30: #{tpu_custom_call.1} parent=5 // pred_check_branch
      %199 = sbr.rel (%p196) target = $region32
    $region31: #{tpu_custom_call.1} parent=5 // pred_region
      %s200 = ssub.s32 %s9, 1
      %s201 = smul.u32 16, %s19
      %s202 = ssub.s32 18, %s201
      %p203 = scmp.lt.s32.totalorder %s202, 16
      %s204 = scalar_select %p203, %s202, 16
      %s205 = smul.u32 8, %s204
      %s206 = smul.u32 %s205, 2
      %p207 = scmp.lt.s32.totalorder %s18, 1
      %s208 = scalar_select %p207, %s18, 1
      %p209 = scmp.lt.s32.totalorder %s201, 17
      %s210 = scalar_select %p209, %s201, 17
      %s211 = smul.addr %s210, 2
      %s212 = smul.addr %s208, 36
      %s213 = sadd.s32 %s211, %s212
      %s214 = smul.addr %s213, 8
      %s215 = scalar_lea.vmem %s0, %s214
      %p216 = pneg %p49
      %p217 = pneg %p46
      %s218 = sadd.s32 %s19, 1
      %s219 = smul.u32 %s218, 8
      %s220 = smul.u32 2, %s219
      %p221 = scmp.lt.s32.totalorder %s18, 1
      %s222 = scalar_select %p221, %s18, 1
      %p223 = scmp.lt.s32.totalorder %s220, 17
      %s224 = scalar_select %p223, %s220, 17
      %s225 = smul.addr %s224, 2
      %s226 = smul.addr %s222, 36
      %s227 = sadd.s32 %s225, %s226
      %s228 = smul.addr %s227, 8
      %s229 = scalar_lea.vmem %s1, %s228
      %p230 = pneg %p81
      %p231 = pneg %p78
      %p232 = pneg %p102
      %p233 = pneg %p99
      %p234 = pneg %p130
      %p235 = pneg %p127
      %s236 = smul.u32 16, %s19
      %p237 = scmp.lt.s32.totalorder %s18, 1
      %s238 = scalar_select %p237, %s18, 1
      %p239 = scmp.lt.s32.totalorder %s236, 15
      %s240 = scalar_select %p239, %s236, 15
      %s241 = smul.addr %s240, 2
      %s242 = smul.addr %s238, 32
      %s243 = sadd.s32 %s241, %s242
      %s244 = smul.addr %s243, 8
      %s245 = scalar_lea.vmem %s3, %s244
      %s246 = smul.u32 16, %s19
      %s247 = ssub.s32 18, %s246
      %p248 = scmp.lt.s32.totalorder %s247, 16
      %s249 = scalar_select %p248, %s247, 16
      %s250 = smul.u32 8, %s249
      %s251 = smul.u32 %s250, 2
      %p252 = scmp.lt.s32.totalorder %s18, 1
      %s253 = scalar_select %p252, %s18, 1
      %p254 = scmp.lt.s32.totalorder %s246, 17
      %s255 = scalar_select %p254, %s246, 17
      %s256 = smul.addr %s255, 2
      %s257 = smul.addr %s253, 36
      %s258 = sadd.s32 %s256, %s257
      %s259 = smul.addr %s258, 8
      %s260 = scalar_lea.vmem %s0, %s259
      %s261 = smul.u32 16, %s19
      %s262 = ssub.s32 18, %s261
      %p263 = scmp.lt.s32.totalorder %s262, 16
      %s264 = scalar_select %p263, %s262, 16
      %s265 = smul.u32 8, %s264
      %s266 = smul.u32 %s265, 2
      %s267 = sadd.s32 %s19, 1
      %s268 = smul.u32 %s267, 8
      %s269 = smul.u32 2, %s268
      %p270 = scmp.lt.s32.totalorder %s18, 1
      %s271 = scalar_select %p270, %s18, 1
      %p272 = scmp.lt.s32.totalorder %s269, 17
      %s273 = scalar_select %p272, %s269, 17
      %s274 = smul.addr %s273, 2
      %s275 = smul.addr %s271, 36
      %s276 = sadd.s32 %s274, %s275
      %s277 = smul.addr %s276, 8
      %s278 = scalar_lea.vmem %s1, %s277
      %s279 = sadd.s32 %s19, 1
      %s280 = smul.u32 %s279, 8
      %s281 = smul.u32 2, %s280
      %s282 = smul.u32 16, %s19
      %p283 = scmp.lt.s32.totalorder %s18, 1
      %s284 = scalar_select %p283, %s18, 1
      %p285 = scmp.lt.s32.totalorder %s282, 15
      %s286 = scalar_select %p285, %s282, 15
      %s287 = smul.addr %s286, 2
      %s288 = smul.addr %s284, 32
      %s289 = sadd.s32 %s287, %s288
      %s290 = smul.addr %s289, 8
      %s291 = scalar_lea.vmem %s3, %s290
      %s292 = smul.u32 16, %s19
      %v293 = vld [vmem:[%s260] sm:$0xff]
      %v294 = vld [vmem:[%s260 + $0x8] sm:$0xff]
      %v295 = vld [vmem:[%s260 + $0x10] sm:$0xff]
      %v296 = vld [vmem:[%s260 + $0x18] sm:$0xff]
      %v297 = vld [vmem:[%s260 + $0x20] sm:$0xff]
      %v298 = vld [vmem:[%s260 + $0x28] sm:$0xff]
      %v299 = vld [vmem:[%s260 + $0x30] sm:$0xff]
      %v300 = vld [vmem:[%s260 + $0x38] sm:$0xff]
      %v301 = vld [vmem:[%s260 + $0x40] sm:$0xff]
      %v302 = vld [vmem:[%s260 + $0x48] sm:$0xff]
      %v303 = vld [vmem:[%s260 + $0x50] sm:$0xff]
      %v304 = vld [vmem:[%s260 + $0x58] sm:$0xff]
      %v305 = vld [vmem:[%s260 + $0x60] sm:$0xff]
      %v306 = vld [vmem:[%s260 + $0x68] sm:$0xff]
      %v307 = vld [vmem:[%s260 + $0x70] sm:$0xff]
      %v308 = vld [vmem:[%s260 + $0x78] sm:$0xff]
      %v309 = vld [vmem:[%s260 + $0x80] sm:$0xff]
      %v310 = vld [vmem:[%s260 + $0x88] sm:$0xff]
      %v311 = vld [vmem:[%s260 + $0x90] sm:$0xff]
      %v312 = vld [vmem:[%s260 + $0x98] sm:$0xff]
      %v313 = vld [vmem:[%s260 + $0xa0] sm:$0xff]
      %v314 = vld [vmem:[%s260 + $0xa8] sm:$0xff]
      %v315 = vld [vmem:[%s260 + $0xb0] sm:$0xff]
      %v316 = vld [vmem:[%s260 + $0xb8] sm:$0xff]
      %v317 = vld [vmem:[%s260 + $0xc0] sm:$0xff]
      %v318 = vld [vmem:[%s260 + $0xc8] sm:$0xff]
      %v319 = vld [vmem:[%s260 + $0xd0] sm:$0xff]
      %v320 = vld [vmem:[%s260 + $0xd8] sm:$0xff]
      %v321 = vld [vmem:[%s260 + $0xe0] sm:$0xff]
      %v322 = vld [vmem:[%s260 + $0xe8] sm:$0xff]
      %v323 = vld [vmem:[%s260 + $0xf0] sm:$0xff]
      %v324 = vld [vmem:[%s260 + $0xf8] sm:$0xff]
      %vm325 = vcmask 97280
      %326 = vst.msk [vmem:[#allocation2] sm:$0xff] %vm325, %v293
      %327 = vst.msk [vmem:[#allocation2 + $0x8] sm:$0xff] %vm325, %v294
      %328 = vst.msk [vmem:[#allocation2 + $0x10] sm:$0xff] %vm325, %v295
      %329 = vst.msk [vmem:[#allocation2 + $0x18] sm:$0xff] %vm325, %v296
      %330 = vst.msk [vmem:[#allocation2 + $0x20] sm:$0xff] %vm325, %v297
      %331 = vst.msk [vmem:[#allocation2 + $0x28] sm:$0xff] %vm325, %v298
      %332 = vst.msk [vmem:[#allocation2 + $0x30] sm:$0xff] %vm325, %v299
      %333 = vst.msk [vmem:[#allocation2 + $0x38] sm:$0xff] %vm325, %v300
      %334 = vst.msk [vmem:[#allocation2 + $0x40] sm:$0xff] %vm325, %v301
      %335 = vst.msk [vmem:[#allocation2 + $0x48] sm:$0xff] %vm325, %v302
      %336 = vst.msk [vmem:[#allocation2 + $0x50] sm:$0xff] %vm325, %v303
      %337 = vst.msk [vmem:[#allocation2 + $0x58] sm:$0xff] %vm325, %v304
      %338 = vst.msk [vmem:[#allocation2 + $0x60] sm:$0xff] %vm325, %v305
      %339 = vst.msk [vmem:[#allocation2 + $0x68] sm:$0xff] %vm325, %v306
      %340 = vst.msk [vmem:[#allocation2 + $0x70] sm:$0xff] %vm325, %v307
      %341 = vst.msk [vmem:[#allocation2 + $0x78] sm:$0xff] %vm325, %v308
      %342 = vst.msk [vmem:[#allocation2 + $0x80] sm:$0xff] %vm325, %v309
      %343 = vst.msk [vmem:[#allocation2 + $0x88] sm:$0xff] %vm325, %v310
      %344 = vst.msk [vmem:[#allocation2 + $0x90] sm:$0xff] %vm325, %v311
      %345 = vst.msk [vmem:[#allocation2 + $0x98] sm:$0xff] %vm325, %v312
      %346 = vst.msk [vmem:[#allocation2 + $0xa0] sm:$0xff] %vm325, %v313
      %347 = vst.msk [vmem:[#allocation2 + $0xa8] sm:$0xff] %vm325, %v314
      %348 = vst.msk [vmem:[#allocation2 + $0xb0] sm:$0xff] %vm325, %v315
      %349 = vst.msk [vmem:[#allocation2 + $0xb8] sm:$0xff] %vm325, %v316
      %350 = vst.msk [vmem:[#allocation2 + $0xc0] sm:$0xff] %vm325, %v317
      %351 = vst.msk [vmem:[#allocation2 + $0xc8] sm:$0xff] %vm325, %v318
      %352 = vst.msk [vmem:[#allocation2 + $0xd0] sm:$0xff] %vm325, %v319
      %353 = vst.msk [vmem:[#allocation2 + $0xd8] sm:$0xff] %vm325, %v320
      %354 = vst.msk [vmem:[#allocation2 + $0xe0] sm:$0xff] %vm325, %v321
      %355 = vst.msk [vmem:[#allocation2 + $0xe8] sm:$0xff] %vm325, %v322
      %356 = vst.msk [vmem:[#allocation2 + $0xf0] sm:$0xff] %vm325, %v323
      %357 = vst.msk [vmem:[#allocation2 + $0xf8] sm:$0xff] %vm325, %v324
      %v358 = vld [vmem:[%s278] sm:$0xff]
      %v359 = vld [vmem:[%s278 + $0x8] sm:$0xff]
      %v360 = vld [vmem:[%s278 + $0x10] sm:$0xff]
      %v361 = vld [vmem:[%s278 + $0x18] sm:$0xff]
      %s362 = scalar_lea.vmem [#allocation2], 256
      %363 = vst.msk [vmem:[%s362] sm:$0xff] %vm325, %v358
      %364 = vst.msk [vmem:[%s362 + $0x8] sm:$0xff] %vm325, %v359
      %365 = vst.msk [vmem:[%s362 + $0x10] sm:$0xff] %vm325, %v360
      %366 = vst.msk [vmem:[%s362 + $0x18] sm:$0xff] %vm325, %v361
      %v367 = vld [vmem:[#allocation2] sm:$0xff]
      %v368 = vld [vmem:[#allocation2 + $0x8] sm:$0xff]
      %v369 = vld [vmem:[#allocation2 + $0x10] sm:$0xff]
      %v370 = vld [vmem:[#allocation2 + $0x18] sm:$0xff]
      %v371 = vld [vmem:[#allocation2 + $0x20] sm:$0xff]
      %v372 = vld [vmem:[#allocation2 + $0x28] sm:$0xff]
      %v373 = vld [vmem:[#allocation2 + $0x30] sm:$0xff]
      %v374 = vld [vmem:[#allocation2 + $0x38] sm:$0xff]
      %v375 = vld [vmem:[#allocation2 + $0x40] sm:$0xff]
      %v376 = vld [vmem:[#allocation2 + $0x48] sm:$0xff]
      %v377 = vld [vmem:[#allocation2 + $0x50] sm:$0xff]
      %v378 = vld [vmem:[#allocation2 + $0x58] sm:$0xff]
      %v379 = vld [vmem:[#allocation2 + $0x60] sm:$0xff]
      %v380 = vld [vmem:[#allocation2 + $0x68] sm:$0xff]
      %v381 = vld [vmem:[#allocation2 + $0x70] sm:$0xff]
      %v382 = vld [vmem:[#allocation2 + $0x78] sm:$0xff]
      %v383 = vld [vmem:[#allocation2 + $0x80] sm:$0xff]
      %v384 = vld [vmem:[#allocation2 + $0x88] sm:$0xff]
      %v385 = vld [vmem:[#allocation2 + $0x90] sm:$0xff]
      %v386 = vld [vmem:[#allocation2 + $0x98] sm:$0xff]
      %v387 = vld [vmem:[#allocation2 + $0xa0] sm:$0xff]
      %v388 = vld [vmem:[#allocation2 + $0xa8] sm:$0xff]
      %v389 = vld [vmem:[#allocation2 + $0xb0] sm:$0xff]
      %v390 = vld [vmem:[#allocation2 + $0xb8] sm:$0xff]
      %v391 = vld [vmem:[#allocation2 + $0xc0] sm:$0xff]
      %v392 = vld [vmem:[#allocation2 + $0xc8] sm:$0xff]
      %v393 = vld [vmem:[#allocation2 + $0xd0] sm:$0xff]
      %v394 = vld [vmem:[#allocation2 + $0xd8] sm:$0xff]
      %v395 = vld [vmem:[#allocation2 + $0xe0] sm:$0xff]
      %v396 = vld [vmem:[#allocation2 + $0xe8] sm:$0xff]
      %v397 = vld [vmem:[#allocation2 + $0xf0] sm:$0xff]
      %v398 = vld [vmem:[#allocation2 + $0xf8] sm:$0xff]
      %v399 = vld [vmem:[%s2] sm:$0xff]
      %v400 = vld [vmem:[%s2 + $0x8] sm:$0xf]
      %s401 = scalar_lea.vmem [#allocation2], 16
      %v402 = vld [vmem:[%s401] sm:$0xff]
      %v403 = vld [vmem:[%s401 + $0x8] sm:$0xff]
      %v404 = vld [vmem:[%s401 + $0x10] sm:$0xff]
      %v405 = vld [vmem:[%s401 + $0x18] sm:$0xff]
      %v406 = vld [vmem:[%s401 + $0x20] sm:$0xff]
      %v407 = vld [vmem:[%s401 + $0x28] sm:$0xff]
      %v408 = vld [vmem:[%s401 + $0x30] sm:$0xff]
      %v409 = vld [vmem:[%s401 + $0x38] sm:$0xff]
      %v410 = vld [vmem:[%s401 + $0x40] sm:$0xff]
      %v411 = vld [vmem:[%s401 + $0x48] sm:$0xff]
      %v412 = vld [vmem:[%s401 + $0x50] sm:$0xff]
      %v413 = vld [vmem:[%s401 + $0x58] sm:$0xff]
      %v414 = vld [vmem:[%s401 + $0x60] sm:$0xff]
      %v415 = vld [vmem:[%s401 + $0x68] sm:$0xff]
      %v416 = vld [vmem:[%s401 + $0x70] sm:$0xff]
      %v417 = vld [vmem:[%s401 + $0x78] sm:$0xff]
      %v418 = vld [vmem:[%s401 + $0x80] sm:$0xff]
      %v419 = vld [vmem:[%s401 + $0x88] sm:$0xff]
      %v420 = vld [vmem:[%s401 + $0x90] sm:$0xff]
      %v421 = vld [vmem:[%s401 + $0x98] sm:$0xff]
      %v422 = vld [vmem:[%s401 + $0xa0] sm:$0xff]
      %v423 = vld [vmem:[%s401 + $0xa8] sm:$0xff]
      %v424 = vld [vmem:[%s401 + $0xb0] sm:$0xff]
      %v425 = vld [vmem:[%s401 + $0xb8] sm:$0xff]
      %v426 = vld [vmem:[%s401 + $0xc0] sm:$0xff]
      %v427 = vld [vmem:[%s401 + $0xc8] sm:$0xff]
      %v428 = vld [vmem:[%s401 + $0xd0] sm:$0xff]
      %v429 = vld [vmem:[%s401 + $0xd8] sm:$0xff]
      %v430 = vld [vmem:[%s401 + $0xe0] sm:$0xff]
      %v431 = vld [vmem:[%s401 + $0xe8] sm:$0xff]
      %v432 = vld [vmem:[%s401 + $0xf0] sm:$0xff]
      %v433 = vld [vmem:[%s401 + $0xf8] sm:$0xff]
      %s434 = scalar_lea.vmem %s2, 16
      %v435 = vld [vmem:[%s434] sm:$0xff]
      %v436 = vld [vmem:[%s434 + $0x8] sm:$0xf]
      %v438 = vsel %vm325, %v402, 0
      %v441 = vsel %vm325, %v403, 0
      %v444 = vsel %vm325, %v404, 0
      %v447 = vsel %vm325, %v405, 0
      %v450 = vsel %vm325, %v406, 0
      %v453 = vsel %vm325, %v407, 0
      %v456 = vsel %vm325, %v408, 0
      %v459 = vsel %vm325, %v409, 0
      %v462 = vsel %vm325, %v410, 0
      %v465 = vsel %vm325, %v411, 0
      %v468 = vsel %vm325, %v412, 0
      %v471 = vsel %vm325, %v413, 0
      %v474 = vsel %vm325, %v414, 0
      %v477 = vsel %vm325, %v415, 0
      %v480 = vsel %vm325, %v416, 0
      %v483 = vsel %vm325, %v417, 0
      %v486 = vsel %vm325, %v418, 0
      %v489 = vsel %vm325, %v419, 0
      %v492 = vsel %vm325, %v420, 0
      %v495 = vsel %vm325, %v421, 0
      %v498 = vsel %vm325, %v422, 0
      %v501 = vsel %vm325, %v423, 0
      %v504 = vsel %vm325, %v424, 0
      %v507 = vsel %vm325, %v425, 0
      %v510 = vsel %vm325, %v426, 0
      %v513 = vsel %vm325, %v427, 0
      %v516 = vsel %vm325, %v428, 0
      %v519 = vsel %vm325, %v429, 0
      %v522 = vsel %vm325, %v430, 0
      %v525 = vsel %vm325, %v431, 0
      %v528 = vsel %vm325, %v432, 0
      %v531 = vsel %vm325, %v433, 0
      %vm533 = vcmask 1043456
      %v535 = vsel %vm533, %v436, 0
      %537 = vmatpush.msra.mxu0 0.0
      %538 = vmatpush.msra.mxu0 0.0
      %539 = vmatpush.msra.mxu0 0.0
      %540 = vmatpush.msra.mxu0 0.0
      %541 = vmatpush.msra.mxu0 0.0
      %542 = vmatpush.msra.mxu0 0.0
      %543 = vmatpush.msra.mxu0 0.0
      %544 = vmatpush.msra.mxu0 0.0
      %545 = vmatpush.msra.mxu0 0.0
      %546 = vmatpush.msra.mxu0 0.0
      %547 = vmatpush.msra.mxu0 0.0
      %548 = vmatpush.msra.mxu0 0.0
      %549 = vmatpush.msra.mxu0 0.0
      %550 = vmatpush.msra.mxu0 0.0
      %551 = vmatpush.msra.mxu0 %v535
      %552 = vmatpush.msra.mxu0 %v435
      %553 = vmatmul.f32.gmra.mxu0 %v438
      %v554 = vpop.f32.mrf.mxu0
      %v555 = vadd.f32 0.0, %v554
      %556 = vmatmul.f32.gmra.mxu0 %v441
      %v557 = vpop.f32.mrf.mxu0
      %v558 = vadd.f32 0.0, %v557
      %559 = vmatmul.f32.gmra.mxu0 %v444
      %v560 = vpop.f32.mrf.mxu0
      %v561 = vadd.f32 0.0, %v560
      %562 = vmatmul.f32.gmra.mxu0 %v447
      %v563 = vpop.f32.mrf.mxu0
      %v564 = vadd.f32 0.0, %v563
      %565 = vmatmul.f32.gmra.mxu0 %v450
      %v566 = vpop.f32.mrf.mxu0
      %v567 = vadd.f32 0.0, %v566
      %568 = vmatmul.f32.gmra.mxu0 %v453
      %v569 = vpop.f32.mrf.mxu0
      %v570 = vadd.f32 0.0, %v569
      %571 = vmatmul.f32.gmra.mxu0 %v456
      %v572 = vpop.f32.mrf.mxu0
      %v573 = vadd.f32 0.0, %v572
      %574 = vmatmul.f32.gmra.mxu0 %v459
      %v575 = vpop.f32.mrf.mxu0
      %v576 = vadd.f32 0.0, %v575
      %577 = vmatmul.f32.gmra.mxu0 %v462
      %v578 = vpop.f32.mrf.mxu0
      %v579 = vadd.f32 0.0, %v578
      %580 = vmatmul.f32.gmra.mxu0 %v465
      %v581 = vpop.f32.mrf.mxu0
      %v582 = vadd.f32 0.0, %v581
      %583 = vmatmul.f32.gmra.mxu0 %v468
      %v584 = vpop.f32.mrf.mxu0
      %v585 = vadd.f32 0.0, %v584
      %586 = vmatmul.f32.gmra.mxu0 %v471
      %v587 = vpop.f32.mrf.mxu0
      %v588 = vadd.f32 0.0, %v587
      %589 = vmatmul.f32.gmra.mxu0 %v474
      %v590 = vpop.f32.mrf.mxu0
      %v591 = vadd.f32 0.0, %v590
      %592 = vmatmul.f32.gmra.mxu0 %v477
      %v593 = vpop.f32.mrf.mxu0
      %v594 = vadd.f32 0.0, %v593
      %595 = vmatmul.f32.gmra.mxu0 %v480
      %v596 = vpop.f32.mrf.mxu0
      %v597 = vadd.f32 0.0, %v596
      %598 = vmatmul.f32.gmra.mxu0 %v483
      %v599 = vpop.f32.mrf.mxu0
      %v600 = vadd.f32 0.0, %v599
      %601 = vmatmul.f32.gmra.mxu0 %v486
      %v602 = vpop.f32.mrf.mxu0
      %v603 = vadd.f32 0.0, %v602
      %604 = vmatmul.f32.gmra.mxu0 %v489
      %v605 = vpop.f32.mrf.mxu0
      %v606 = vadd.f32 0.0, %v605
      %607 = vmatmul.f32.gmra.mxu0 %v492
      %v608 = vpop.f32.mrf.mxu0
      %v609 = vadd.f32 0.0, %v608
      %610 = vmatmul.f32.gmra.mxu0 %v495
      %v611 = vpop.f32.mrf.mxu0
      %v612 = vadd.f32 0.0, %v611
      %613 = vmatmul.f32.gmra.mxu0 %v498
      %v614 = vpop.f32.mrf.mxu0
      %v615 = vadd.f32 0.0, %v614
      %616 = vmatmul.f32.gmra.mxu0 %v501
      %v617 = vpop.f32.mrf.mxu0
      %v618 = vadd.f32 0.0, %v617
      %619 = vmatmul.f32.gmra.mxu0 %v504
      %v620 = vpop.f32.mrf.mxu0
      %v621 = vadd.f32 0.0, %v620
      %622 = vmatmul.f32.gmra.mxu0 %v507
      %v623 = vpop.f32.mrf.mxu0
      %v624 = vadd.f32 0.0, %v623
      %625 = vmatmul.f32.gmra.mxu0 %v510
      %v626 = vpop.f32.mrf.mxu0
      %v627 = vadd.f32 0.0, %v626
      %628 = vmatmul.f32.gmra.mxu0 %v513
      %v629 = vpop.f32.mrf.mxu0
      %v630 = vadd.f32 0.0, %v629
      %631 = vmatmul.f32.gmra.mxu0 %v516
      %v632 = vpop.f32.mrf.mxu0
      %v633 = vadd.f32 0.0, %v632
      %634 = vmatmul.f32.gmra.mxu0 %v519
      %v635 = vpop.f32.mrf.mxu0
      %v636 = vadd.f32 0.0, %v635
      %637 = vmatmul.f32.gmra.mxu0 %v522
      %v638 = vpop.f32.mrf.mxu0
      %v639 = vadd.f32 0.0, %v638
      %640 = vmatmul.f32.gmra.mxu0 %v525
      %v641 = vpop.f32.mrf.mxu0
      %v642 = vadd.f32 0.0, %v641
      %643 = vmatmul.f32.gmra.mxu0 %v528
      %v644 = vpop.f32.mrf.mxu0
      %v645 = vadd.f32 0.0, %v644
      %646 = vmatmul.f32.gmra.mxu0 %v531
      %v647 = vpop.f32.mrf.mxu0
      %v648 = vadd.f32 0.0, %v647
      %649 = vdwg.mxu0
      %v651 = vsel %vm325, %v367, 0
      %v654 = vsel %vm325, %v368, 0
      %v657 = vsel %vm325, %v369, 0
      %v660 = vsel %vm325, %v370, 0
      %v663 = vsel %vm325, %v371, 0
      %v666 = vsel %vm325, %v372, 0
      %v669 = vsel %vm325, %v373, 0
      %v672 = vsel %vm325, %v374, 0
      %v675 = vsel %vm325, %v375, 0
      %v678 = vsel %vm325, %v376, 0
      %v681 = vsel %vm325, %v377, 0
      %v684 = vsel %vm325, %v378, 0
      %v687 = vsel %vm325, %v379, 0
      %v690 = vsel %vm325, %v380, 0
      %v693 = vsel %vm325, %v381, 0
      %v696 = vsel %vm325, %v382, 0
      %v699 = vsel %vm325, %v383, 0
      %v702 = vsel %vm325, %v384, 0
      %v705 = vsel %vm325, %v385, 0
      %v708 = vsel %vm325, %v386, 0
      %v711 = vsel %vm325, %v387, 0
      %v714 = vsel %vm325, %v388, 0
      %v717 = vsel %vm325, %v389, 0
      %v720 = vsel %vm325, %v390, 0
      %v723 = vsel %vm325, %v391, 0
      %v726 = vsel %vm325, %v392, 0
      %v729 = vsel %vm325, %v393, 0
      %v732 = vsel %vm325, %v394, 0
      %v735 = vsel %vm325, %v395, 0
      %v738 = vsel %vm325, %v396, 0
      %v741 = vsel %vm325, %v397, 0
      %v744 = vsel %vm325, %v398, 0
      %v747 = vsel %vm533, %v400, 0
      %749 = vmatpush.msra.mxu0 0.0
      %750 = vmatpush.msra.mxu0 0.0
      %751 = vmatpush.msra.mxu0 0.0
      %752 = vmatpush.msra.mxu0 0.0
      %753 = vmatpush.msra.mxu0 0.0
      %754 = vmatpush.msra.mxu0 0.0
      %755 = vmatpush.msra.mxu0 0.0
      %756 = vmatpush.msra.mxu0 0.0
      %757 = vmatpush.msra.mxu0 0.0
      %758 = vmatpush.msra.mxu0 0.0
      %759 = vmatpush.msra.mxu0 0.0
      %760 = vmatpush.msra.mxu0 0.0
      %761 = vmatpush.msra.mxu0 0.0
      %762 = vmatpush.msra.mxu0 0.0
      %763 = vmatpush.msra.mxu0 %v747
      %764 = vmatpush.msra.mxu0 %v399
      %765 = vmatmul.f32.gmra.mxu0 %v651
      %v766 = vpop.f32.mrf.mxu0
      %v767 = vadd.f32 %v555, %v766
      %768 = vmatmul.f32.gmra.mxu0 %v654
      %v769 = vpop.f32.mrf.mxu0
      %v770 = vadd.f32 %v558, %v769
      %771 = vmatmul.f32.gmra.mxu0 %v657
      %v772 = vpop.f32.mrf.mxu0
      %v773 = vadd.f32 %v561, %v772
      %774 = vmatmul.f32.gmra.mxu0 %v660
      %v775 = vpop.f32.mrf.mxu0
      %v776 = vadd.f32 %v564, %v775
      %777 = vmatmul.f32.gmra.mxu0 %v663
      %v778 = vpop.f32.mrf.mxu0
      %v779 = vadd.f32 %v567, %v778
      %780 = vmatmul.f32.gmra.mxu0 %v666
      %v781 = vpop.f32.mrf.mxu0
      %v782 = vadd.f32 %v570, %v781
      %783 = vmatmul.f32.gmra.mxu0 %v669
      %v784 = vpop.f32.mrf.mxu0
      %v785 = vadd.f32 %v573, %v784
      %786 = vmatmul.f32.gmra.mxu0 %v672
      %v787 = vpop.f32.mrf.mxu0
      %v788 = vadd.f32 %v576, %v787
      %789 = vmatmul.f32.gmra.mxu0 %v675
      %v790 = vpop.f32.mrf.mxu0
      %v791 = vadd.f32 %v579, %v790
      %792 = vmatmul.f32.gmra.mxu0 %v678
      %v793 = vpop.f32.mrf.mxu0
      %v794 = vadd.f32 %v582, %v793
      %795 = vmatmul.f32.gmra.mxu0 %v681
      %v796 = vpop.f32.mrf.mxu0
      %v797 = vadd.f32 %v585, %v796
      %798 = vmatmul.f32.gmra.mxu0 %v684
      %v799 = vpop.f32.mrf.mxu0
      %v800 = vadd.f32 %v588, %v799
      %801 = vmatmul.f32.gmra.mxu0 %v687
      %v802 = vpop.f32.mrf.mxu0
      %v803 = vadd.f32 %v591, %v802
      %804 = vmatmul.f32.gmra.mxu0 %v690
      %v805 = vpop.f32.mrf.mxu0
      %v806 = vadd.f32 %v594, %v805
      %807 = vmatmul.f32.gmra.mxu0 %v693
      %v808 = vpop.f32.mrf.mxu0
      %v809 = vadd.f32 %v597, %v808
      %810 = vmatmul.f32.gmra.mxu0 %v696
      %v811 = vpop.f32.mrf.mxu0
      %v812 = vadd.f32 %v600, %v811
      %813 = vmatmul.f32.gmra.mxu0 %v699
      %v814 = vpop.f32.mrf.mxu0
      %v815 = vadd.f32 %v603, %v814
      %816 = vmatmul.f32.gmra.mxu0 %v702
      %v817 = vpop.f32.mrf.mxu0
      %v818 = vadd.f32 %v606, %v817
      %819 = vmatmul.f32.gmra.mxu0 %v705
      %v820 = vpop.f32.mrf.mxu0
      %v821 = vadd.f32 %v609, %v820
      %822 = vmatmul.f32.gmra.mxu0 %v708
      %v823 = vpop.f32.mrf.mxu0
      %v824 = vadd.f32 %v612, %v823
      %825 = vmatmul.f32.gmra.mxu0 %v711
      %v826 = vpop.f32.mrf.mxu0
      %v827 = vadd.f32 %v615, %v826
      %828 = vmatmul.f32.gmra.mxu0 %v714
      %v829 = vpop.f32.mrf.mxu0
      %v830 = vadd.f32 %v618, %v829
      %831 = vmatmul.f32.gmra.mxu0 %v717
      %v832 = vpop.f32.mrf.mxu0
      %v833 = vadd.f32 %v621, %v832
      %834 = vmatmul.f32.gmra.mxu0 %v720
      %v835 = vpop.f32.mrf.mxu0
      %v836 = vadd.f32 %v624, %v835
      %837 = vmatmul.f32.gmra.mxu0 %v723
      %v838 = vpop.f32.mrf.mxu0
      %v839 = vadd.f32 %v627, %v838
      %840 = vmatmul.f32.gmra.mxu0 %v726
      %v841 = vpop.f32.mrf.mxu0
      %v842 = vadd.f32 %v630, %v841
      %843 = vmatmul.f32.gmra.mxu0 %v729
      %v844 = vpop.f32.mrf.mxu0
      %v845 = vadd.f32 %v633, %v844
      %846 = vmatmul.f32.gmra.mxu0 %v732
      %v847 = vpop.f32.mrf.mxu0
      %v848 = vadd.f32 %v636, %v847
      %849 = vmatmul.f32.gmra.mxu0 %v735
      %v850 = vpop.f32.mrf.mxu0
      %v851 = vadd.f32 %v639, %v850
      %852 = vmatmul.f32.gmra.mxu0 %v738
      %v853 = vpop.f32.mrf.mxu0
      %v854 = vadd.f32 %v642, %v853
      %855 = vmatmul.f32.gmra.mxu0 %v741
      %v856 = vpop.f32.mrf.mxu0
      %v857 = vadd.f32 %v645, %v856
      %858 = vmatmul.f32.gmra.mxu0 %v744
      %v859 = vpop.f32.mrf.mxu0
      %v860 = vadd.f32 %v648, %v859
      %861 = vdwg.mxu0
      %s862 = scalar_lea.vmem [#allocation2], 32
      %v863 = vld [vmem:[%s862] sm:$0xff]
      %v864 = vld [vmem:[%s862 + $0x8] sm:$0xff]
      %v865 = vld [vmem:[%s862 + $0x10] sm:$0xff]
      %v866 = vld [vmem:[%s862 + $0x18] sm:$0xff]
      %v867 = vld [vmem:[%s862 + $0x20] sm:$0xff]
      %v868 = vld [vmem:[%s862 + $0x28] sm:$0xff]
      %v869 = vld [vmem:[%s862 + $0x30] sm:$0xff]
      %v870 = vld [vmem:[%s862 + $0x38] sm:$0xff]
      %v871 = vld [vmem:[%s862 + $0x40] sm:$0xff]
      %v872 = vld [vmem:[%s862 + $0x48] sm:$0xff]
      %v873 = vld [vmem:[%s862 + $0x50] sm:$0xff]
      %v874 = vld [vmem:[%s862 + $0x58] sm:$0xff]
      %v875 = vld [vmem:[%s862 + $0x60] sm:$0xff]
      %v876 = vld [vmem:[%s862 + $0x68] sm:$0xff]
      %v877 = vld [vmem:[%s862 + $0x70] sm:$0xff]
      %v878 = vld [vmem:[%s862 + $0x78] sm:$0xff]
      %v879 = vld [vmem:[%s862 + $0x80] sm:$0xff]
      %v880 = vld [vmem:[%s862 + $0x88] sm:$0xff]
      %v881 = vld [vmem:[%s862 + $0x90] sm:$0xff]
      %v882 = vld [vmem:[%s862 + $0x98] sm:$0xff]
      %v883 = vld [vmem:[%s862 + $0xa0] sm:$0xff]
      %v884 = vld [vmem:[%s862 + $0xa8] sm:$0xff]
      %v885 = vld [vmem:[%s862 + $0xb0] sm:$0xff]
      %v886 = vld [vmem:[%s862 + $0xb8] sm:$0xff]
      %v887 = vld [vmem:[%s862 + $0xc0] sm:$0xff]
      %v888 = vld [vmem:[%s862 + $0xc8] sm:$0xff]
      %v889 = vld [vmem:[%s862 + $0xd0] sm:$0xff]
      %v890 = vld [vmem:[%s862 + $0xd8] sm:$0xff]
      %v891 = vld [vmem:[%s862 + $0xe0] sm:$0xff]
      %v892 = vld [vmem:[%s862 + $0xe8] sm:$0xff]
      %v893 = vld [vmem:[%s862 + $0xf0] sm:$0xff]
      %v894 = vld [vmem:[%s862 + $0xf8] sm:$0xff]
      %s895 = scalar_lea.vmem %s2, 32
      %v896 = vld [vmem:[%s895] sm:$0xff]
      %v897 = vld [vmem:[%s895 + $0x8] sm:$0xf]
      %v899 = vsel %vm325, %v863, 0
      %v902 = vsel %vm325, %v864, 0
      %v905 = vsel %vm325, %v865, 0
      %v908 = vsel %vm325, %v866, 0
      %v911 = vsel %vm325, %v867, 0
      %v914 = vsel %vm325, %v868, 0
      %v917 = vsel %vm325, %v869, 0
      %v920 = vsel %vm325, %v870, 0
      %v923 = vsel %vm325, %v871, 0
      %v926 = vsel %vm325, %v872, 0
      %v929 = vsel %vm325, %v873, 0
      %v932 = vsel %vm325, %v874, 0
      %v935 = vsel %vm325, %v875, 0
      %v938 = vsel %vm325, %v876, 0
      %v941 = vsel %vm325, %v877, 0
      %v944 = vsel %vm325, %v878, 0
      %v947 = vsel %vm325, %v879, 0
      %v950 = vsel %vm325, %v880, 0
      %v953 = vsel %vm325, %v881, 0
      %v956 = vsel %vm325, %v882, 0
      %v959 = vsel %vm325, %v883, 0
      %v962 = vsel %vm325, %v884, 0
      %v965 = vsel %vm325, %v885, 0
      %v968 = vsel %vm325, %v886, 0
      %v971 = vsel %vm325, %v887, 0
      %v974 = vsel %vm325, %v888, 0
      %v977 = vsel %vm325, %v889, 0
      %v980 = vsel %vm325, %v890, 0
      %v983 = vsel %vm325, %v891, 0
      %v986 = vsel %vm325, %v892, 0
      %v989 = vsel %vm325, %v893, 0
      %v992 = vsel %vm325, %v894, 0
      %v995 = vsel %vm533, %v897, 0
      %997 = vmatpush.msra.mxu0 0.0
      %998 = vmatpush.msra.mxu0 0.0
      %999 = vmatpush.msra.mxu0 0.0
      %1000 = vmatpush.msra.mxu0 0.0
      %1001 = vmatpush.msra.mxu0 0.0
      %1002 = vmatpush.msra.mxu0 0.0
      %1003 = vmatpush.msra.mxu0 0.0
      %1004 = vmatpush.msra.mxu0 0.0
      %1005 = vmatpush.msra.mxu0 0.0
      %1006 = vmatpush.msra.mxu0 0.0
      %1007 = vmatpush.msra.mxu0 0.0
      %1008 = vmatpush.msra.mxu0 0.0
      %1009 = vmatpush.msra.mxu0 0.0
      %1010 = vmatpush.msra.mxu0 0.0
      %1011 = vmatpush.msra.mxu0 %v995
      %1012 = vmatpush.msra.mxu0 %v896
      %1013 = vmatmul.f32.gmra.mxu0 %v899
      %v1014 = vpop.f32.mrf.mxu0
      %v1015 = vadd.f32 0.0, %v1014
      %1016 = vmatmul.f32.gmra.mxu0 %v902
      %v1017 = vpop.f32.mrf.mxu0
      %v1018 = vadd.f32 0.0, %v1017
      %1019 = vmatmul.f32.gmra.mxu0 %v905
      %v1020 = vpop.f32.mrf.mxu0
      %v1021 = vadd.f32 0.0, %v1020
      %1022 = vmatmul.f32.gmra.mxu0 %v908
      %v1023 = vpop.f32.mrf.mxu0
      %v1024 = vadd.f32 0.0, %v1023
      %1025 = vmatmul.f32.gmra.mxu0 %v911
      %v1026 = vpop.f32.mrf.mxu0
      %v1027 = vadd.f32 0.0, %v1026
      %1028 = vmatmul.f32.gmra.mxu0 %v914
      %v1029 = vpop.f32.mrf.mxu0
      %v1030 = vadd.f32 0.0, %v1029
      %1031 = vmatmul.f32.gmra.mxu0 %v917
      %v1032 = vpop.f32.mrf.mxu0
      %v1033 = vadd.f32 0.0, %v1032
      %1034 = vmatmul.f32.gmra.mxu0 %v920
      %v1035 = vpop.f32.mrf.mxu0
      %v1036 = vadd.f32 0.0, %v1035
      %1037 = vmatmul.f32.gmra.mxu0 %v923
      %v1038 = vpop.f32.mrf.mxu0
      %v1039 = vadd.f32 0.0, %v1038
      %1040 = vmatmul.f32.gmra.mxu0 %v926
      %v1041 = vpop.f32.mrf.mxu0
      %v1042 = vadd.f32 0.0, %v1041
      %1043 = vmatmul.f32.gmra.mxu0 %v929
      %v1044 = vpop.f32.mrf.mxu0
      %v1045 = vadd.f32 0.0, %v1044
      %1046 = vmatmul.f32.gmra.mxu0 %v932
      %v1047 = vpop.f32.mrf.mxu0
      %v1048 = vadd.f32 0.0, %v1047
      %1049 = vmatmul.f32.gmra.mxu0 %v935
      %v1050 = vpop.f32.mrf.mxu0
      %v1051 = vadd.f32 0.0, %v1050
      %1052 = vmatmul.f32.gmra.mxu0 %v938
      %v1053 = vpop.f32.mrf.mxu0
      %v1054 = vadd.f32 0.0, %v1053
      %1055 = vmatmul.f32.gmra.mxu0 %v941
      %v1056 = vpop.f32.mrf.mxu0
      %v1057 = vadd.f32 0.0, %v1056
      %1058 = vmatmul.f32.gmra.mxu0 %v944
      %v1059 = vpop.f32.mrf.mxu0
      %v1060 = vadd.f32 0.0, %v1059
      %1061 = vmatmul.f32.gmra.mxu0 %v947
      %v1062 = vpop.f32.mrf.mxu0
      %v1063 = vadd.f32 0.0, %v1062
      %1064 = vmatmul.f32.gmra.mxu0 %v950
      %v1065 = vpop.f32.mrf.mxu0
      %v1066 = vadd.f32 0.0, %v1065
      %1067 = vmatmul.f32.gmra.mxu0 %v953
      %v1068 = vpop.f32.mrf.mxu0
      %v1069 = vadd.f32 0.0, %v1068
      %1070 = vmatmul.f32.gmra.mxu0 %v956
      %v1071 = vpop.f32.mrf.mxu0
      %v1072 = vadd.f32 0.0, %v1071
      %1073 = vmatmul.f32.gmra.mxu0 %v959
      %v1074 = vpop.f32.mrf.mxu0
      %v1075 = vadd.f32 0.0, %v1074
      %1076 = vmatmul.f32.gmra.mxu0 %v962
      %v1077 = vpop.f32.mrf.mxu0
      %v1078 = vadd.f32 0.0, %v1077
      %1079 = vmatmul.f32.gmra.mxu0 %v965
      %v1080 = vpop.f32.mrf.mxu0
      %v1081 = vadd.f32 0.0, %v1080
      %1082 = vmatmul.f32.gmra.mxu0 %v968
      %v1083 = vpop.f32.mrf.mxu0
      %v1084 = vadd.f32 0.0, %v1083
      %1085 = vmatmul.f32.gmra.mxu0 %v971
      %v1086 = vpop.f32.mrf.mxu0
      %v1087 = vadd.f32 0.0, %v1086
      %1088 = vmatmul.f32.gmra.mxu0 %v974
      %v1089 = vpop.f32.mrf.mxu0
      %v1090 = vadd.f32 0.0, %v1089
      %1091 = vmatmul.f32.gmra.mxu0 %v977
      %v1092 = vpop.f32.mrf.mxu0
      %v1093 = vadd.f32 0.0, %v1092
      %1094 = vmatmul.f32.gmra.mxu0 %v980
      %v1095 = vpop.f32.mrf.mxu0
      %v1096 = vadd.f32 0.0, %v1095
      %1097 = vmatmul.f32.gmra.mxu0 %v983
      %v1098 = vpop.f32.mrf.mxu0
      %v1099 = vadd.f32 0.0, %v1098
      %1100 = vmatmul.f32.gmra.mxu0 %v986
      %v1101 = vpop.f32.mrf.mxu0
      %v1102 = vadd.f32 0.0, %v1101
      %1103 = vmatmul.f32.gmra.mxu0 %v989
      %v1104 = vpop.f32.mrf.mxu0
      %v1105 = vadd.f32 0.0, %v1104
      %1106 = vmatmul.f32.gmra.mxu0 %v992
      %v1107 = vpop.f32.mrf.mxu0
      %v1108 = vadd.f32 0.0, %v1107
      %1109 = vdwg.mxu0
      %v1110 = vadd.f32 %v767, %v1015
      %v1111 = vadd.f32 %v770, %v1018
      %v1112 = vadd.f32 %v773, %v1021
      %v1113 = vadd.f32 %v776, %v1024
      %v1114 = vadd.f32 %v779, %v1027
      %v1115 = vadd.f32 %v782, %v1030
      %v1116 = vadd.f32 %v785, %v1033
      %v1117 = vadd.f32 %v788, %v1036
      %v1118 = vadd.f32 %v791, %v1039
      %v1119 = vadd.f32 %v794, %v1042
      %v1120 = vadd.f32 %v797, %v1045
      %v1121 = vadd.f32 %v800, %v1048
      %v1122 = vadd.f32 %v803, %v1051
      %v1123 = vadd.f32 %v806, %v1054
      %v1124 = vadd.f32 %v809, %v1057
      %v1125 = vadd.f32 %v812, %v1060
      %v1126 = vadd.f32 %v815, %v1063
      %v1127 = vadd.f32 %v818, %v1066
      %v1128 = vadd.f32 %v821, %v1069
      %v1129 = vadd.f32 %v824, %v1072
      %v1130 = vadd.f32 %v827, %v1075
      %v1131 = vadd.f32 %v830, %v1078
      %v1132 = vadd.f32 %v833, %v1081
      %v1133 = vadd.f32 %v836, %v1084
      %v1134 = vadd.f32 %v839, %v1087
      %v1135 = vadd.f32 %v842, %v1090
      %v1136 = vadd.f32 %v845, %v1093
      %v1137 = vadd.f32 %v848, %v1096
      %v1138 = vadd.f32 %v851, %v1099
      %v1139 = vadd.f32 %v854, %v1102
      %v1140 = vadd.f32 %v857, %v1105
      %v1141 = vadd.f32 %v860, %v1108
      %vm1142 = vcmask 64512
      %1143 = vst.msk [vmem:[%s291] sm:$0xff] %vm1142, %v1110
      %1144 = vst.msk [vmem:[%s291 + $0x8] sm:$0xff] %vm1142, %v1111
      %1145 = vst.msk [vmem:[%s291 + $0x10] sm:$0xff] %vm1142, %v1112
      %1146 = vst.msk [vmem:[%s291 + $0x18] sm:$0xff] %vm1142, %v1113
      %1147 = vst.msk [vmem:[%s291 + $0x20] sm:$0xff] %vm1142, %v1114
      %1148 = vst.msk [vmem:[%s291 + $0x28] sm:$0xff] %vm1142, %v1115
      %1149 = vst.msk [vmem:[%s291 + $0x30] sm:$0xff] %vm1142, %v1116
      %1150 = vst.msk [vmem:[%s291 + $0x38] sm:$0xff] %vm1142, %v1117
      %1151 = vst.msk [vmem:[%s291 + $0x40] sm:$0xff] %vm1142, %v1118
      %1152 = vst.msk [vmem:[%s291 + $0x48] sm:$0xff] %vm1142, %v1119
      %1153 = vst.msk [vmem:[%s291 + $0x50] sm:$0xff] %vm1142, %v1120
      %1154 = vst.msk [vmem:[%s291 + $0x58] sm:$0xff] %vm1142, %v1121
      %1155 = vst.msk [vmem:[%s291 + $0x60] sm:$0xff] %vm1142, %v1122
      %1156 = vst.msk [vmem:[%s291 + $0x68] sm:$0xff] %vm1142, %v1123
      %1157 = vst.msk [vmem:[%s291 + $0x70] sm:$0xff] %vm1142, %v1124
      %1158 = vst.msk [vmem:[%s291 + $0x78] sm:$0xff] %vm1142, %v1125
      %1159 = vst.msk [vmem:[%s291 + $0x80] sm:$0xff] %vm1142, %v1126
      %1160 = vst.msk [vmem:[%s291 + $0x88] sm:$0xff] %vm1142, %v1127
      %1161 = vst.msk [vmem:[%s291 + $0x90] sm:$0xff] %vm1142, %v1128
      %1162 = vst.msk [vmem:[%s291 + $0x98] sm:$0xff] %vm1142, %v1129
      %1163 = vst.msk [vmem:[%s291 + $0xa0] sm:$0xff] %vm1142, %v1130
      %1164 = vst.msk [vmem:[%s291 + $0xa8] sm:$0xff] %vm1142, %v1131
      %1165 = vst.msk [vmem:[%s291 + $0xb0] sm:$0xff] %vm1142, %v1132
      %1166 = vst.msk [vmem:[%s291 + $0xb8] sm:$0xff] %vm1142, %v1133
      %1167 = vst.msk [vmem:[%s291 + $0xc0] sm:$0xff] %vm1142, %v1134
      %1168 = vst.msk [vmem:[%s291 + $0xc8] sm:$0xff] %vm1142, %v1135
      %1169 = vst.msk [vmem:[%s291 + $0xd0] sm:$0xff] %vm1142, %v1136
      %1170 = vst.msk [vmem:[%s291 + $0xd8] sm:$0xff] %vm1142, %v1137
      %1171 = vst.msk [vmem:[%s291 + $0xe0] sm:$0xff] %vm1142, %v1138
      %1172 = vst.msk [vmem:[%s291 + $0xe8] sm:$0xff] %vm1142, %v1139
      %1173 = vst.msk [vmem:[%s291 + $0xf0] sm:$0xff] %vm1142, %v1140
      %1174 = vst.msk [vmem:[%s291 + $0xf8] sm:$0xff] %vm1142, %v1141
      %s1175 = smul.u32 16, %s19
      %p1176 = scmp.lt.s32.totalorder %s18, 1
      %s1177 = scalar_select %p1176, %s18, 1
      %p1178 = scmp.lt.s32.totalorder %s1175, 15
      %s1179 = scalar_select %p1178, %s1175, 15
      %s1180 = smul.addr %s1179, 2
      %s1181 = smul.addr %s1177, 32
      %s1182 = sadd.s32 %s1180, %s1181
      %s1183 = smul.addr %s1182, 8
      %s1184 = scalar_lea.vmem %s3, %s1183
      // Predicated region
      $region33: #{tpu_custom_call.1} parent=31 // pred_check
        %p1185 = pneg %p127
      $region34: #{tpu_custom_call.1} parent=31 // pred_check_branch
        %1187 = sbr.rel (%p1185) target = $region36
      $region35: #{tpu_custom_call.1} parent=31 // pred_region
        %s1188 = smul.u32 16, %s19
      $region36: #{tpu_custom_call.1} parent=31 // pred_fallthru
        _
    $region32: #{tpu_custom_call.1} parent=5 // pred_fallthru
      _
    %p1189 = scmp.le.s32.totalorder 2, %s9
    // Predicated region
    $region37: #{tpu_custom_call.1} parent=5 // pred_check
      %p1190 = pneg %p1189
    $region38: #{tpu_custom_call.1} parent=5 // pred_check_branch
      %1192 = sbr.rel (%p1190) target = $region40
    $region39: #{tpu_custom_call.1} parent=5 // pred_region
      %s1193 = ssub.s32 %s9, 2
      // Predicated region
      $region41: #{tpu_custom_call.1} parent=39 // pred_check
        %p1194 = pneg %p133
      $region42: #{tpu_custom_call.1} parent=39 // pred_check_branch
        %1196 = sbr.rel (%p1194) target = $region44
      $region43: #{tpu_custom_call.1} parent=39 // pred_region
        %s1197 = smul.u32 16, %s21
        %p1198 = scmp.lt.s32.totalorder %s20, 1
        %s1199 = scalar_select %p1198, %s20, 1
        %p1200 = scmp.lt.s32.totalorder %s1197, 15
        %s1201 = scalar_select %p1200, %s1197, 15
        %s1202 = smul.addr %s1201, 2
        %s1203 = smul.addr %s1199, 32
        %s1204 = sadd.s32 %s1202, %s1203
        %s1205 = smul.addr %s1204, 8
        %s1206 = scalar_lea.vmem %s3, %s1205
      $region44: #{tpu_custom_call.1} parent=39 // pred_fallthru
        _
    $region40: #{tpu_custom_call.1} parent=5 // pred_fallthru
      _
  $region6: #{tpu_custom_call.1} parent=0 // loop_footer
    %s13 = sadd.s32 1, %s9
  $region7: #{tpu_custom_call.1} parent=0 // loop_footer_branch
    %8 = sbr.rel target = $region3
  $region8: #{tpu_custom_call.1} parent=0 // loop_exit
    _

</llo_original>
